<compile_context>
chip_gen: v7x
topology: tpu7x:2x2x1
jax: 0.10.0
libtpu: 0.0.40
codegen_flags: <defaults>
</compile_context>

<pallas_src>
import functools

import jax
import jax.numpy as jnp
from jax.experimental import pallas as pl
from jax.experimental.pallas import tpu as pltpu


# ----------------------------------------------------------------------------
# Fused kernel.  Grid axis i = 0..K-1 walks the conv taps j = K-1-i (Horner
# order).  Per step:
#     acc[r, :] <- (x[r, :] @ W_j) + acc[r + 1, :]
# so after the last step acc[b*Lp + t, c] = sum_j x[b, t + j, :] @ W_j[:, c],
# i.e. the Conv1d output of every branch packed along the 128 output lanes.
# Rows that are invalid for a given branch (t >= L - k_b + 1) only ever
# accumulate finite garbage (cross-batch / zero-padded reads land on lanes
# whose packed weight slab is zero for the taps that matter) and are excluded
# from the BN statistics and the max pool by the in-kernel mask.
# ----------------------------------------------------------------------------
def _fused_kernel(x_ref, w_ref, const_ref, o_ref, acc_ref, *, batch, lp, eps):
    i = pl.program_id(0)
    n_rows, c4 = acc_ref.shape

    # Lane-dense MXU matmul with all branches packed to N = c4 (=128).
    yj = jnp.dot(x_ref[...], w_ref[...], preferred_element_type=jnp.float32)

    @pl.when(i == 0)
    def _init():
        acc_ref[...] = yj

    @pl.when(i != 0)
    def _accumulate():
        prev = acc_ref[...]
        # Horner step: shift the accumulator up by one row (zero-fill at the
        # end; rows that would read past the end only land on masked rows).
        shifted = jnp.concatenate(
            [prev[1:], jnp.zeros((1, c4), jnp.float32)], axis=0)
        acc_ref[...] = yj + shifted

    @pl.when(i == pl.num_programs(0) - 1)
    def _finalize():
        y = acc_ref[...]                      # (B*Lp, c4) conv output (no bias:
        t_valid = const_ref[0:1, :]           #  it cancels in train-mode BN)
        inv_cnt = const_ref[1:2, :]           # 1 / (B * T_b) per channel
        gamma = const_ref[2:3, :]
        beta = const_ref[3:4, :]

        # Validity mask built in-kernel (no HBM mask traffic): time index t is
        # valid for branch b iff t < L - k_b + 1 (same for every batch row).
        t_idx = jax.lax.broadcasted_iota(
            jnp.int32, (1, lp, c4), 1).astype(jnp.float32)
        m3 = (t_idx < t_valid.reshape(1, 1, c4)).astype(jnp.float32)  # (1,Lp,c4)

        y3 = y.reshape(batch, lp, c4)
        ym3 = y3 * m3
        # One-pass masked BatchNorm1d train-mode statistics (biased).
        s1 = jnp.sum(ym3.reshape(n_rows, c4), axis=0, keepdims=True)
        s2 = jnp.sum((ym3 * y3).reshape(n_rows, c4), axis=0, keepdims=True)
        mean = s1 * inv_cnt
        var = jnp.maximum(s2 * inv_cnt - mean * mean, 0.0)
        scale = gamma * jax.lax.rsqrt(var + eps)
        shift = beta - mean * scale
        # ReLU output >= 0, so zeroing masked rows preserves the max pool.
        yr3 = jnp.maximum(
            y3 * scale.reshape(1, 1, c4) + shift.reshape(1, 1, c4), 0.0) * m3
        o_ref[...] = jnp.max(yr3, axis=1)     # (B, c4)


def fastcnn_forward(x, params, *, eps=1e-5, matmul_dtype=jnp.bfloat16):
    """x: (B, L, 768) float32  ->  (B, len(params) * channel) float32."""
    B, L, Cin = x.shape
    n_br = len(params)
    C = params[0]["w"].shape[0]
    C4 = n_br * C
    K = max(p["k"] for p in params)
    if L < K:
        raise ValueError(f"sequence length {L} must be >= max kernel size {K}")

    Lp = -(-L // 16) * 16          # pad time axis to a bf16-friendly sublane count
    Np = B * Lp

    x_pad = jnp.pad(x, ((0, 0), (0, Lp - L), (0, 0)))
    x2 = x_pad.astype(matmul_dtype).reshape(Np, Cin)   # free, layout-preserving

    # Pack per-branch conv weights into K lane-dense slabs:
    #   w_pack[j][:, b*C:(b+1)*C] = W_b[:, :, j].T   (zero for j >= k_b).
    w_pack = jnp.zeros((K, Cin, C4), jnp.float32)
    for bi, p in enumerate(params):
        k = p["k"]
        wt = jnp.transpose(p["w"], (2, 1, 0))                 # (k, Cin, C)
        w_pack = w_pack.at[:k, :, bi * C:(bi + 1) * C].set(wt)
    # Kernel consumes taps j = K-1, ..., 0 (Horner order): reverse along axis 0.
    w_pack = w_pack[::-1].astype(matmul_dtype)

    # Per-channel constants packed into one tiny (4, C4) f32 slab:
    #   row 0: valid time-step count threshold T_b = L - k_b + 1
    #   row 1: 1 / (B * T_b)      row 2: BN gamma      row 3: BN beta
    t_valid = jnp.concatenate(
        [jnp.full((C,), L - p["k"] + 1, jnp.float32) for p in params])
    inv_cnt = 1.0 / (B * t_valid)
    gamma = jnp.concatenate([p["gamma"] for p in params])
    beta = jnp.concatenate([p["beta"] for p in params])
    consts = jnp.stack([t_valid, inv_cnt, gamma, beta], axis=0)   # (4, C4)

    kernel = functools.partial(_fused_kernel, batch=B, lp=Lp, eps=eps)
    return pl.pallas_call(
        kernel,
        out_shape=jax.ShapeDtypeStruct((B, C4), jnp.float32),
        grid=(K,),
        in_specs=[
            pl.BlockSpec((Np, Cin), lambda i: (0, 0)),           # x: DMA'd once, resident
            pl.BlockSpec((None, Cin, C4), lambda i: (i, 0, 0)),  # W_j: pipelined per tap
            pl.BlockSpec((4, C4), lambda i: (0, 0)),             # packed BN/mask constants
        ],
        out_specs=pl.BlockSpec((B, C4), lambda i: (0, 0)),       # lane-dense (B, 128)
        scratch_shapes=[pltpu.VMEM((Np, C4), jnp.float32)],      # conv accumulator
        compiler_params=pltpu.CompilerParams(
            dimension_semantics=("arbitrary",),
            vmem_limit_bytes=32 * 1024 * 1024),
    )(x2, w_pack, consts)


def make_fastcnn_params(key, channel=32, kernel_sizes=(1, 2, 4, 8), in_ch=768):
    """Deterministic synthetic parameters (PyTorch-shaped)."""
    params = []
    for k in kernel_sizes:
        key, kw, kb, kg, kbe = jax.random.split(key, 5)
        fan_in = in_ch * k
        w = jax.random.normal(kw, (channel, in_ch, k), jnp.float32) / jnp.sqrt(fan_in)
        b = 0.1 * jax.random.normal(kb, (channel,), jnp.float32)
        gamma = 1.0 + 0.1 * jax.random.normal(kg, (channel,), jnp.float32)
        beta = 0.1 * jax.random.normal(kbe, (channel,), jnp.float32)
        params.append({"w": w, "b": b, "gamma": gamma, "beta": beta, "k": k})
    return params


def fastcnn_reference(x, params, eps=1e-5):
    """Pure-JAX f32 reference of the PyTorch forward (train-mode BN, with bias)."""
    outs = []
    for p in params:
        k = p["k"]
        T = x.shape[1] - k + 1
        cols = jnp.stack([x[:, j:j + T, :] for j in range(k)], axis=-1)  # (B,T,Cin,k)
        y = jnp.einsum("btcj,ocj->bto", cols, p["w"]) + p["b"]
        mean = jnp.mean(y, axis=(0, 1))
        var = jnp.mean((y - mean) ** 2, axis=(0, 1))
        yn = (y - mean) * jax.lax.rsqrt(var + eps) * p["gamma"] + p["beta"]
        outs.append(jnp.max(jnp.maximum(yn, 0.0), axis=1))
    return jnp.concatenate(outs, axis=1)


if __name__ == "__main__":
    key = jax.random.PRNGKey(0)
    k_x, k_p = jax.random.split(key)

    B, L, Cin = 2, 16, 768          # Cin = 768 is fixed by the module definition
    channel = 32
    x = jax.random.normal(k_x, (B, L, Cin), jnp.float32)
    params = make_fastcnn_params(k_p, channel=channel)

    out = jax.block_until_ready(fastcnn_forward(x, params))
    ref = jax.block_until_ready(fastcnn_reference(x, params))

    assert out.shape == (B, 4 * channel), out.shape
    assert bool(jnp.all(jnp.isfinite(out)))
    err = float(jnp.max(jnp.abs(out - ref)))
    assert err < 7.5e-2, f"max abs error vs reference: {err}"
    print("KERNEL_OK")
</pallas_src>

<mosaic_0001>
module attributes {stable_mosaic.version = 11 : i64} {
  func.func @_fused_kernel(%arg0: i32, %arg1: memref<32x768xbf16, #tpu.memory_space<vmem>>, %arg2: memref<1x768x128xbf16, #tpu.memory_space<vmem>>, %arg3: memref<4x128xf32, #tpu.memory_space<vmem>>, %arg4: memref<2x128xf32, #tpu.memory_space<vmem>>, %arg5: memref<32x128xf32, #tpu.memory_space<vmem>>) attributes {dimension_semantics = [#tpu.dimension_semantics<arbitrary>], iteration_bounds = array<i64: 8>, scalar_prefetch = 0 : i64, scratch_operands = 1 : i64, tpu.core_type = #tpu.core_type<tc>, window_params = [{pipeline_mode = #tpu.pipeline_mode<synchronous>, transform_indices = @transform_0, window_bounds = array<i64: 32, 768>}, {transform_indices = @transform_1, window_bounds = array<i64: 1, 768, 128>}, {pipeline_mode = #tpu.pipeline_mode<synchronous>, transform_indices = @transform_2, window_bounds = array<i64: 4, 128>}, {pipeline_mode = #tpu.pipeline_mode<synchronous>, transform_indices = @transform_3, window_bounds = array<i64: 2, 128>}]} {
    %c0 = arith.constant 0 : index
    %c0_0 = arith.constant 0 : index
    %0 = vector.load %arg1[%c0, %c0_0] : memref<32x768xbf16, #tpu.memory_space<vmem>>, vector<32x768xbf16>
    %c0_1 = arith.constant 0 : index
    %c0_2 = arith.constant 0 : index
    %c0_3 = arith.constant 0 : index
    %1 = vector.load %arg2[%c0_1, %c0_2, %c0_3] : memref<1x768x128xbf16, #tpu.memory_space<vmem>>, vector<1x768x128xbf16>
    %2 = vector.shape_cast %1 : vector<1x768x128xbf16> to vector<768x128xbf16>
    %cst = arith.constant dense<0.000000e+00> : vector<32x128xf32>
    %3 = tpu.matmul %0, %2, %cst {dimension_numbers = #tpu.dot_dimension_numbers<[1], [0], [0], [1], [0, 0, 1, 1], [], []>} : vector<32x768xbf16>, vector<768x128xbf16>, vector<32x128xf32> -> vector<32x128xf32>
    %c0_i32 = arith.constant 0 : i32
    %4 = arith.cmpi eq, %arg0, %c0_i32 : i32
    %5 = arith.extui %4 : i1 to i32
    %c0_i32_4 = arith.constant 0 : i32
    %6 = arith.cmpi ne, %5, %c0_i32_4 : i32
    scf.if %6 {
      %c0_8 = arith.constant 0 : index
      %c0_9 = arith.constant 0 : index
      %13 = vector.load %arg5[%c0_8, %c0_9] : memref<32x128xf32, #tpu.memory_space<vmem>>, vector<32x128xf32>
      tpu.vector_store %arg5[%c0_8, %c0_9], %3 {strides = array<i32>} : memref<32x128xf32, #tpu.memory_space<vmem>>, vector<32x128xf32>,
    } else {
    }
    %c0_i32_5 = arith.constant 0 : i32
    %7 = arith.cmpi ne, %arg0, %c0_i32_5 : i32
    %8 = arith.extui %7 : i1 to i32
    %c0_i32_6 = arith.constant 0 : i32
    %9 = arith.cmpi ne, %8, %c0_i32_6 : i32
    scf.if %9 {
      %c0_8 = arith.constant 0 : index
      %c0_9 = arith.constant 0 : index
      %13 = vector.load %arg5[%c0_8, %c0_9] : memref<32x128xf32, #tpu.memory_space<vmem>>, vector<32x128xf32>
      %14 = vector.extract_strided_slice %13 {offsets = [1, 0], sizes = [31, 128], strides = [1, 1]} : vector<32x128xf32> to vector<31x128xf32>
      %cst_10 = arith.constant 0.000000e+00 : f32
      %15 = vector.broadcast %cst_10 : f32 to vector<1x128xf32>
      %16 = tpu.concatenate %14, %15 in 0 : vector<31x128xf32>, vector<1x128xf32> -> vector<32x128xf32>
      %17 = arith.addf %3, %16 : vector<32x128xf32>
      %c0_11 = arith.constant 0 : index
      %c0_12 = arith.constant 0 : index
      %18 = vector.load %arg5[%c0_11, %c0_12] : memref<32x128xf32, #tpu.memory_space<vmem>>, vector<32x128xf32>
      tpu.vector_store %arg5[%c0_11, %c0_12], %17 {strides = array<i32>} : memref<32x128xf32, #tpu.memory_space<vmem>>, vector<32x128xf32>,
    } else {
    }
    %c7_i32 = arith.constant 7 : i32
    %10 = arith.cmpi eq, %arg0, %c7_i32 : i32
    %11 = arith.extui %10 : i1 to i32
    %c0_i32_7 = arith.constant 0 : i32
    %12 = arith.cmpi ne, %11, %c0_i32_7 : i32
    scf.if %12 {
      %c0_8 = arith.constant 0 : index
      %c0_9 = arith.constant 0 : index
      %13 = vector.load %arg5[%c0_8, %c0_9] : memref<32x128xf32, #tpu.memory_space<vmem>>, vector<32x128xf32>
      %c0_10 = arith.constant 0 : index
      %c0_11 = arith.constant 0 : index
      %14 = vector.load %arg3[%c0_10, %c0_11] : memref<4x128xf32, #tpu.memory_space<vmem>>, vector<1x128xf32>
      %c1 = arith.constant 1 : index
      %c0_12 = arith.constant 0 : index
      %15 = vector.load %arg3[%c1, %c0_12] : memref<4x128xf32, #tpu.memory_space<vmem>>, vector<1x128xf32>
      %c2 = arith.constant 2 : index
      %c0_13 = arith.constant 0 : index
      %16 = vector.load %arg3[%c2, %c0_13] : memref<4x128xf32, #tpu.memory_space<vmem>>, vector<1x128xf32>
      %c3 = arith.constant 3 : index
      %c0_14 = arith.constant 0 : index
      %17 = vector.load %arg3[%c3, %c0_14] : memref<4x128xf32, #tpu.memory_space<vmem>>, vector<1x128xf32>
      %18 = tpu.iota {dimensions = array<i32: 1>} : vector<1x16x128xi32>
      %19 = arith.sitofp %18 : vector<1x16x128xi32> to vector<1x16x128xf32>
      %20 = vector.shape_cast %14 : vector<1x128xf32> to vector<1x1x128xf32>
      %21 = vector.broadcast %20 : vector<1x1x128xf32> to vector<1x16x128xf32>
      %22 = arith.cmpf olt, %19, %21 : vector<1x16x128xf32>
      %23 = arith.extui %22 : vector<1x16x128xi1> to vector<1x16x128xi32>
      %24 = arith.sitofp %23 : vector<1x16x128xi32> to vector<1x16x128xf32>
      %25 = vector.shape_cast %13 : vector<32x128xf32> to vector<2x16x128xf32>
      %26 = vector.broadcast %24 : vector<1x16x128xf32> to vector<2x16x128xf32>
      %27 = arith.mulf %25, %26 : vector<2x16x128xf32>
      %28 = vector.shape_cast %27 : vector<2x16x128xf32> to vector<32x128xf32>
      %cst_15 = arith.constant dense<0.000000e+00> : vector<128xf32>
      %29 = vector.multi_reduction <add>, %28, %cst_15 [0] : vector<32x128xf32> to vector<128xf32>
      %30 = vector.shape_cast %29 : vector<128xf32> to vector<1x128xf32>
      %31 = arith.mulf %27, %25 : vector<2x16x128xf32>
      %32 = vector.shape_cast %31 : vector<2x16x128xf32> to vector<32x128xf32>
      %cst_16 = arith.constant dense<0.000000e+00> : vector<128xf32>
      %33 = vector.multi_reduction <add>, %32, %cst_16 [0] : vector<32x128xf32> to vector<128xf32>
      %34 = vector.shape_cast %33 : vector<128xf32> to vector<1x128xf32>
      %35 = arith.mulf %30, %15 : vector<1x128xf32>
      %36 = arith.mulf %34, %15 : vector<1x128xf32>
      %37 = arith.mulf %35, %35 : vector<1x128xf32>
      %38 = arith.subf %36, %37 : vector<1x128xf32>
      %cst_17 = arith.constant 0.000000e+00 : f32
      %39 = vector.broadcast %cst_17 : f32 to vector<1x128xf32>
      %40 = arith.maximumf %38, %39 : vector<1x128xf32>
      %cst_18 = arith.constant 9.99999974E-6 : f32
      %41 = vector.broadcast %cst_18 : f32 to vector<1x128xf32>
      %42 = arith.addf %40, %41 : vector<1x128xf32>
      %43 = math.rsqrt %42 : vector<1x128xf32>
      %44 = arith.mulf %16, %43 : vector<1x128xf32>
      %45 = arith.mulf %35, %44 : vector<1x128xf32>
      %46 = arith.subf %17, %45 : vector<1x128xf32>
      %47 = vector.shape_cast %44 : vector<1x128xf32> to vector<1x1x128xf32>
      %48 = vector.broadcast %47 : vector<1x1x128xf32> to vector<2x16x128xf32>
      %49 = arith.mulf %25, %48 : vector<2x16x128xf32>
      %50 = vector.shape_cast %46 : vector<1x128xf32> to vector<1x1x128xf32>
      %51 = vector.broadcast %50 : vector<1x1x128xf32> to vector<2x16x128xf32>
      %52 = arith.addf %49, %51 : vector<2x16x128xf32>
      %cst_19 = arith.constant 0.000000e+00 : f32
      %53 = vector.broadcast %cst_19 : f32 to vector<2x16x128xf32>
      %54 = arith.maximumf %52, %53 : vector<2x16x128xf32>
      %55 = vector.broadcast %24 : vector<1x16x128xf32> to vector<2x16x128xf32>
      %56 = arith.mulf %54, %55 : vector<2x16x128xf32>
      %cst_20 = arith.constant dense<0xFF800000> : vector<2x128xf32>
      %57 = vector.multi_reduction <maximumf>, %56, %cst_20 [1] : vector<2x16x128xf32> to vector<2x128xf32>
      %c0_21 = arith.constant 0 : index
      %c0_22 = arith.constant 0 : index
      %58 = vector.load %arg4[%c0_21, %c0_22] : memref<2x128xf32, #tpu.memory_space<vmem>>, vector<2x128xf32>
      tpu.vector_store %arg4[%c0_21, %c0_22], %57 {strides = array<i32>} : memref<2x128xf32, #tpu.memory_space<vmem>>, vector<2x128xf32>,
    } else {
    }
    return
  }
  func.func @transform_0(%arg0: i32) -> (i32, i32) {
    %c0_i32 = arith.constant 0 : i32
    %c0_i32_0 = arith.constant 0 : i32
    %c0_i32_1 = arith.constant 0 : i32
    return %c0_i32, %c0_i32_0 : i32, i32
  }
  func.func @transform_1(%arg0: i32) -> (i32, i32, i32) {
    %c0_i32 = arith.constant 0 : i32
    %c0_i32_0 = arith.constant 0 : i32
    %c0_i32_1 = arith.constant 0 : i32
    return %arg0, %c0_i32, %c0_i32_0 : i32, i32, i32
  }
  func.func @transform_2(%arg0: i32) -> (i32, i32) {
    %c0_i32 = arith.constant 0 : i32
    %c0_i32_0 = arith.constant 0 : i32
    %c0_i32_1 = arith.constant 0 : i32
    return %c0_i32, %c0_i32_0 : i32, i32
  }
  func.func @transform_3(%arg0: i32) -> (i32, i32) {
    %c0_i32 = arith.constant 0 : i32
    %c0_i32_0 = arith.constant 0 : i32
    %c0_i32_1 = arith.constant 0 : i32
    return %c0_i32, %c0_i32_0 : i32, i32
  }
}

</mosaic_0001>

<llo_original>
// kernel: tpu_custom_call.1
$region0: #{tpu_custom_call.1}
  #allocation0 [shape = 'u32[]', space=smem, size = 0x4, offset = 0x4, fixed_abs, tag = 'smem constant byte address 0x4 - core index']
  #allocation1 [shape = 'u32[144,128]{1,0:T(1,128)}', space=vmem, size = 0x12000, scoped, tag = 'internal scratch']
  #allocation2 [shape = 'f32[32,128]{1,0:T(8,128)}', space=vmem, size = 0x4000, scoped, tag = 'scratch operand']
  %s0 = inlined_call_operand.hbm [shape: bf16[32,768], index: 0, kind: input, shape index: {}]
  %s1 = inlined_call_operand.hbm [shape: bf16[8,768,128], index: 1, kind: input, shape index: {}]
  %s2 = inlined_call_operand.hbm [shape: f32[4,128], index: 2, kind: input, shape index: {}]
  %s3 = inlined_call_operand.hbm [shape: f32[2,128], index: 3, kind: output, shape index: {}]
  %s4 = sld [smem:[#allocation0]]
  $region69: #{tpu_custom_call.1} parent=0
    _
  %s6 = ssub.s32 1, %s4
  %s7 = scalar_select 0, %s6, %s4
  $region1: #{tpu_custom_call.1} parent=0
    #allocation3 [shape = 'u8[49152]{0}', space=vmem, size = 0xc000, scoped, tag = 'input window, operand 0, single buffered']
    #allocation4 [shape = 's32[2]{0}', space=sflag, size = 0x8, scoped, tag = 'scoped memory for tpu_custom_call.1']
    #allocation5 [shape = 's32[2]{0}', space=sflag, size = 0x8, scoped, tag = 'scoped memory for tpu_custom_call.1']
    #allocation6 [shape = 'u8[393216]{0}', space=vmem, size = 0x60000, scoped, tag = 'input window, operand 1']
    #allocation7 [shape = 's32[2]{0}', space=sflag, size = 0x8, scoped, tag = 'scoped memory for tpu_custom_call.1']
    #allocation8 [shape = 'u8[2048]{0}', space=vmem, size = 0x800, scoped, tag = 'input window, operand 2, single buffered']
    #allocation9 [shape = 'u8[1024]{0}', space=vmem, size = 0x400, scoped, tag = 'output window, operand 0, single buffered']
    %8 = vsyncpa [#allocation4], 0
    %9 = vsyncpa [#allocation7], 0
    %s10 = scalar_lea.sflag [#allocation7], 1
    %11 = vsyncpa %s10, 0
    %12 = vsyncpa [#allocation5], 0
    loop: start=0, step=1, limit=10
    $region2: #{tpu_custom_call.1} parent=1 // loop_pre_header
      _
    $region3: #{tpu_custom_call.1} parent=1 // loop_header
      %s14 = sphi 0, %s18
      %p15 = scmp.ge.s32.totalorder %s14, 10
      %s22 = sphi 0, %s22
      %s24 = sphi 0, %s22
      %s25 = sphi 0, %s24
      %s39 = sphi 0, %s25
      %s45 = sphi 0, %s47
      %s48 = sphi 0, %s45
      %s49 = sphi 0, %s48
      %s65 = sphi 0, %s49
      %s69 = sphi 0, %s69
      %s71 = sphi 0, %s69
      %s72 = sphi 0, %s71
      %s86 = sphi 0, %s72
      %s90 = sphi 0, %s90
      %s92 = sphi 0, %s90
      %s93 = sphi 0, %s92
      %s107 = sphi 0, %s93
    $region4: #{tpu_custom_call.1} parent=1 // loop_header_branch
      %17 = sbr.rel (%p15) target = $region8
    $region5: #{tpu_custom_call.1} parent=1 // loop_body
      %s19 = ssub.s32 %s14, 1
      %s20 = ssub.s32 %s14, 2
      %s21 = sadd.s32 %s14, 1
      %s23 = sadd.s32 %s22, 1
      %p26 = scmp.eq.s32.totalorder %s14, 7
      %p27 = scmp.ne.s32.totalorder %s22, %s24
      %p28 = scmp.eq.s32.totalorder %s14, 0
      %p29 = por %p27, %p28
      %p30 = scmp.ne.s32.totalorder %s22, %s24
      %p31 = scmp.eq.s32.totalorder %s19, 7
      %p32 = por %p30, %p31
      %p33 = scmp.ne.s32.totalorder %s24, %s25
      %p34 = scmp.eq.s32.totalorder %s19, 0
      %p35 = por %p33, %p34
      %p36 = scmp.ne.s32.totalorder %s24, %s25
      %p37 = scmp.eq.s32.totalorder %s20, 7
      %p38 = por %p36, %p37
      %p40 = scmp.ne.s32.totalorder %s25, %s39
      %p41 = scmp.eq.s32.totalorder %s20, 0
      %p42 = por %p40, %p41
      %s43 = ssub.s32 %s14, %s21
      %p44 = scmp.eq.s32.totalorder %s43, 0
      %s46 = sadd.s32 %s45, 1
      %s47 = scalar_select %p44, %s45, %s46
      %p50 = pneg %p44
      %p51 = scmp.eq.s32.totalorder %s14, 7
      %p52 = por %p50, %p51
      %p53 = scmp.ne.s32.totalorder %s45, %s48
      %p54 = scmp.eq.s32.totalorder %s14, 0
      %p55 = por %p53, %p54
      %p56 = scmp.ne.s32.totalorder %s45, %s48
      %p57 = scmp.eq.s32.totalorder %s19, 7
      %p58 = por %p56, %p57
      %p59 = scmp.ne.s32.totalorder %s48, %s49
      %p60 = scmp.eq.s32.totalorder %s19, 0
      %p61 = por %p59, %p60
      %p62 = scmp.ne.s32.totalorder %s48, %s49
      %p63 = scmp.eq.s32.totalorder %s20, 7
      %p64 = por %p62, %p63
      %p66 = scmp.ne.s32.totalorder %s49, %s65
      %p67 = scmp.eq.s32.totalorder %s20, 0
      %p68 = por %p66, %p67
      %s70 = sadd.s32 %s69, 1
      %p73 = scmp.eq.s32.totalorder %s14, 7
      %p74 = scmp.ne.s32.totalorder %s69, %s71
      %p75 = scmp.eq.s32.totalorder %s14, 0
      %p76 = por %p74, %p75
      %p77 = scmp.ne.s32.totalorder %s69, %s71
      %p78 = scmp.eq.s32.totalorder %s19, 7
      %p79 = por %p77, %p78
      %p80 = scmp.ne.s32.totalorder %s71, %s72
      %p81 = scmp.eq.s32.totalorder %s19, 0
      %p82 = por %p80, %p81
      %p83 = scmp.ne.s32.totalorder %s71, %s72
      %p84 = scmp.eq.s32.totalorder %s20, 7
      %p85 = por %p83, %p84
      %p87 = scmp.ne.s32.totalorder %s72, %s86
      %p88 = scmp.eq.s32.totalorder %s20, 0
      %p89 = por %p87, %p88
      %s91 = sadd.s32 %s90, 1
      %p94 = scmp.eq.s32.totalorder %s14, 7
      %p95 = scmp.ne.s32.totalorder %s90, %s92
      %p96 = scmp.eq.s32.totalorder %s14, 0
      %p97 = por %p95, %p96
      %p98 = scmp.ne.s32.totalorder %s90, %s92
      %p99 = scmp.eq.s32.totalorder %s19, 7
      %p100 = por %p98, %p99
      %p101 = scmp.ne.s32.totalorder %s92, %s93
      %p102 = scmp.eq.s32.totalorder %s19, 0
      %p103 = por %p101, %p102
      %p104 = scmp.ne.s32.totalorder %s92, %s93
      %p105 = scmp.eq.s32.totalorder %s20, 7
      %p106 = por %p104, %p105
      %p108 = scmp.ne.s32.totalorder %s93, %s107
      %p109 = scmp.eq.s32.totalorder %s20, 0
      %p110 = por %p108, %p109
      %p111 = scmp.le.s32.totalorder 1, %s14
      %p112 = scmp.lt.s32.totalorder %s14, 9
      %p113 = pnand %p111, %p112
      %p114 = pneg %p113
      // Predicated region
      $region9: #{tpu_custom_call.1} parent=5 // pred_check
        _
      $region10: #{tpu_custom_call.1} parent=5 // pred_check_branch
        %116 = sbr.rel (%p113) target = $region12
      $region11: #{tpu_custom_call.1} parent=5 // pred_region
        %s117 = ssub.s32 %s14, 1
        // Predicated region
        $region13: #{tpu_custom_call.1} parent=11 // pred_check
          %p118 = pneg %p35
        $region14: #{tpu_custom_call.1} parent=11 // pred_check_branch
          %120 = sbr.rel (%p118) target = $region16
        $region15: #{tpu_custom_call.1} parent=11 // pred_region
          %s122 = ssub.s32 1536, 1536
          %123 = vsyncadd [#allocation4], %s122
          %s124 = sshll.u32 [#allocation3], 4
          %s125 = int_to_ptr.vmem [resolvable:$true] %s124
          %130 = dma.hbm_to_vmem [thread:$0]  %s0, 1536, %s125, [#allocation4], 384, 384, 24
        $region16: #{tpu_custom_call.1} parent=11 // pred_fallthru
          _
        // Predicated region
        $region17: #{tpu_custom_call.1} parent=11 // pred_check
          %p131 = pneg %p82
        $region18: #{tpu_custom_call.1} parent=11 // pred_check_branch
          %133 = sbr.rel (%p131) target = $region20
        $region19: #{tpu_custom_call.1} parent=11 // pred_region
          %s135 = ssub.s32 64, 64
          %136 = vsyncadd [#allocation7], %s135
          %s138 = sshll.u32 [#allocation8], 4
          %s139 = int_to_ptr.vmem [resolvable:$true] %s138
          %141 = dma.hbm_to_vmem [thread:$0]  %s2, 64, %s139, [#allocation7]
        $region20: #{tpu_custom_call.1} parent=11 // pred_fallthru
          _
      $region12: #{tpu_custom_call.1} parent=5 // pred_fallthru
        _
      %p142 = scmp.lt.s32.totalorder %s14, 8
      // Predicated region
      $region21: #{tpu_custom_call.1} parent=5 // pred_check
        %p143 = pneg %p142
      $region22: #{tpu_custom_call.1} parent=5 // pred_check_branch
        %145 = sbr.rel (%p143) target = $region24
      $region23: #{tpu_custom_call.1} parent=5 // pred_region
        // Predicated region
        $region25: #{tpu_custom_call.1} parent=23 // pred_check
          %p146 = pneg %p55
        $region26: #{tpu_custom_call.1} parent=23 // pred_check_branch
          %148 = sbr.rel (%p146) target = $region28
        $region27: #{tpu_custom_call.1} parent=23 // pred_region
          %s149 = sand.u32 %s14, 1
          %s150 = scalar_lea.sflag [#allocation7], %s149
          %s151 = sand.u32 %s45, 1
          %s152 = smul.addr %s151, 384
          %s153 = scalar_lea.vmem [#allocation6], %s152
          %s155 = ssub.s32 6144, 6144
          %156 = vsyncadd %s150, %s155
          %s157 = smul.addr %s14, 96
          %s158 = smul.addr %s157, 64
          %s159 = scalar_lea.hbm %s1, %s158
          %s160 = sshll.u32 %s153, 4
          %s161 = int_to_ptr.vmem [resolvable:$true] %s160
          %166 = dma.hbm_to_vmem [thread:$0]  %s159, 6144, %s161, %s150, 64, 64, 4
        $region28: #{tpu_custom_call.1} parent=23 // pred_fallthru
          _
      $region24: #{tpu_custom_call.1} parent=5 // pred_fallthru
        _
      %p167 = scmp.le.s32.totalorder 1, %s14
      %p168 = scmp.lt.s32.totalorder %s14, 9
      %p169 = pnand %p167, %p168
      %p170 = pneg %p169
      // Predicated region
      $region29: #{tpu_custom_call.1} parent=5 // pred_check
        _
      $region30: #{tpu_custom_call.1} parent=5 // pred_check_branch
        %172 = sbr.rel (%p169) target = $region32
      $region31: #{tpu_custom_call.1} parent=5 // pred_region
        %s173 = ssub.s32 %s14, 1
        // Predicated region
        $region33: #{tpu_custom_call.1} parent=31 // pred_check
          %p174 = pneg %p35
        $region34: #{tpu_custom_call.1} parent=31 // pred_check_branch
          %176 = sbr.rel (%p174) target = $region36
        $region35: #{tpu_custom_call.1} parent=31 // pred_region
          %177 = dma.done [#allocation4], 1536
        $region36: #{tpu_custom_call.1} parent=31 // pred_fallthru
          _
        %s178 = sand.u32 %s19, 1
        %s179 = scalar_lea.sflag [#allocation7], %s178
        %s180 = sand.u32 %s48, 1
        %s181 = smul.addr %s180, 384
        %s182 = scalar_lea.vmem [#allocation6], %s181
        // Predicated region
        $region37: #{tpu_custom_call.1} parent=31 // pred_check
          %p183 = pneg %p61
        $region38: #{tpu_custom_call.1} parent=31 // pred_check_branch
          %185 = sbr.rel (%p183) target = $region40
        $region39: #{tpu_custom_call.1} parent=31 // pred_region
          %186 = dma.done %s179, 6144
        $region40: #{tpu_custom_call.1} parent=31 // pred_fallthru
          _
        // Predicated region
        $region41: #{tpu_custom_call.1} parent=31 // pred_check
          %p187 = pneg %p82
        $region42: #{tpu_custom_call.1} parent=31 // pred_check_branch
          %189 = sbr.rel (%p187) target = $region44
        $region43: #{tpu_custom_call.1} parent=31 // pred_region
          %190 = dma.done [#allocation7], 64
        $region44: #{tpu_custom_call.1} parent=31 // pred_fallthru
          _
        %p191 = pneg %p35
        %p192 = pneg %p32
        %s193 = sand.u32 %s19, 1
        %s194 = scalar_lea.sflag [#allocation7], %s193
        %s195 = sand.u32 %s48, 1
        %s196 = smul.addr %s195, 384
        %s197 = scalar_lea.vmem [#allocation6], %s196
        %p198 = pneg %p61
        %p199 = pneg %p58
        %p200 = pneg %p82
        %p201 = pneg %p79
        %p202 = pneg %p103
        %p203 = pneg %p100
        %v205 = vld [vmem:[#allocation3] sm:$0xff]
        %v206 = vld [vmem:[#allocation3 + $0x8] sm:$0xff]
        %v207 = vld [vmem:[#allocation3 + $0x10] sm:$0xff]
        %v208 = vld [vmem:[#allocation3 + $0x18] sm:$0xff]
        %v209 = vld [vmem:[#allocation3 + $0x20] sm:$0xff]
        %v210 = vld [vmem:[#allocation3 + $0x28] sm:$0xff]
        %v211 = vld [vmem:[#allocation3 + $0x30] sm:$0xff]
        %v212 = vld [vmem:[#allocation3 + $0x38] sm:$0xff]
        %v213 = vld [vmem:[#allocation3 + $0x40] sm:$0xff]
        %v214 = vld [vmem:[#allocation3 + $0x48] sm:$0xff]
        %v215 = vld [vmem:[#allocation3 + $0x50] sm:$0xff]
        %v216 = vld [vmem:[#allocation3 + $0x58] sm:$0xff]
        %v217 = vld [vmem:[%s182] sm:$0xf]
        %v218 = vld [vmem:[%s182 + $0x4] sm:$0xf]
        %v219 = vld [vmem:[%s182 + $0x8] sm:$0xf]
        %v220 = vld [vmem:[%s182 + $0xc] sm:$0xf]
        %v221 = vld [vmem:[%s182 + $0x10] sm:$0xf]
        %v222 = vld [vmem:[%s182 + $0x14] sm:$0xf]
        %v223 = vld [vmem:[%s182 + $0x18] sm:$0xf]
        %v224 = vld [vmem:[%s182 + $0x1c] sm:$0xf]
        %v225 = vld [vmem:[%s182 + $0x20] sm:$0xf]
        %v226 = vld [vmem:[%s182 + $0x24] sm:$0xf]
        %v227 = vld [vmem:[%s182 + $0x28] sm:$0xf]
        %v228 = vld [vmem:[%s182 + $0x2c] sm:$0xf]
        %v229 = vld [vmem:[%s182 + $0x30] sm:$0xf]
        %v230 = vld [vmem:[%s182 + $0x34] sm:$0xf]
        %v231 = vld [vmem:[%s182 + $0x38] sm:$0xf]
        %v232 = vld [vmem:[%s182 + $0x3c] sm:$0xf]
        %v233 = vld [vmem:[%s182 + $0x40] sm:$0xf]
        %v234 = vld [vmem:[%s182 + $0x44] sm:$0xf]
        %v235 = vld [vmem:[%s182 + $0x48] sm:$0xf]
        %v236 = vld [vmem:[%s182 + $0x4c] sm:$0xf]
        %v237 = vld [vmem:[%s182 + $0x50] sm:$0xf]
        %v238 = vld [vmem:[%s182 + $0x54] sm:$0xf]
        %v239 = vld [vmem:[%s182 + $0x58] sm:$0xf]
        %v240 = vld [vmem:[%s182 + $0x5c] sm:$0xf]
        %v241 = vld [vmem:[%s182 + $0x60] sm:$0xf]
        %v242 = vld [vmem:[%s182 + $0x64] sm:$0xf]
        %v243 = vld [vmem:[%s182 + $0x68] sm:$0xf]
        %v244 = vld [vmem:[%s182 + $0x6c] sm:$0xf]
        %v245 = vld [vmem:[%s182 + $0x70] sm:$0xf]
        %v246 = vld [vmem:[%s182 + $0x74] sm:$0xf]
        %v247 = vld [vmem:[%s182 + $0x78] sm:$0xf]
        %v248 = vld [vmem:[%s182 + $0x7c] sm:$0xf]
        %v249 = vld [vmem:[%s182 + $0x80] sm:$0xf]
        %v250 = vld [vmem:[%s182 + $0x84] sm:$0xf]
        %v251 = vld [vmem:[%s182 + $0x88] sm:$0xf]
        %v252 = vld [vmem:[%s182 + $0x8c] sm:$0xf]
        %v253 = vld [vmem:[%s182 + $0x90] sm:$0xf]
        %v254 = vld [vmem:[%s182 + $0x94] sm:$0xf]
        %v255 = vld [vmem:[%s182 + $0x98] sm:$0xf]
        %v256 = vld [vmem:[%s182 + $0x9c] sm:$0xf]
        %v257 = vld [vmem:[%s182 + $0xa0] sm:$0xf]
        %v258 = vld [vmem:[%s182 + $0xa4] sm:$0xf]
        %v259 = vld [vmem:[%s182 + $0xa8] sm:$0xf]
        %v260 = vld [vmem:[%s182 + $0xac] sm:$0xf]
        %v261 = vld [vmem:[%s182 + $0xb0] sm:$0xf]
        %v262 = vld [vmem:[%s182 + $0xb4] sm:$0xf]
        %v263 = vld [vmem:[%s182 + $0xb8] sm:$0xf]
        %v264 = vld [vmem:[%s182 + $0xbc] sm:$0xf]
        %v265 = vld [vmem:[%s182 + $0xc0] sm:$0xf]
        %v266 = vld [vmem:[%s182 + $0xc4] sm:$0xf]
        %v267 = vld [vmem:[%s182 + $0xc8] sm:$0xf]
        %v268 = vld [vmem:[%s182 + $0xcc] sm:$0xf]
        %v269 = vld [vmem:[%s182 + $0xd0] sm:$0xf]
        %v270 = vld [vmem:[%s182 + $0xd4] sm:$0xf]
        %v271 = vld [vmem:[%s182 + $0xd8] sm:$0xf]
        %v272 = vld [vmem:[%s182 + $0xdc] sm:$0xf]
        %v273 = vld [vmem:[%s182 + $0xe0] sm:$0xf]
        %v274 = vld [vmem:[%s182 + $0xe4] sm:$0xf]
        %v275 = vld [vmem:[%s182 + $0xe8] sm:$0xf]
        %v276 = vld [vmem:[%s182 + $0xec] sm:$0xf]
        %v277 = vld [vmem:[%s182 + $0xf0] sm:$0xf]
        %v278 = vld [vmem:[%s182 + $0xf4] sm:$0xf]
        %v279 = vld [vmem:[%s182 + $0xf8] sm:$0xf]
        %v280 = vld [vmem:[%s182 + $0xfc] sm:$0xf]
        %v281 = vld [vmem:[%s182 + $0x100] sm:$0xf]
        %v282 = vld [vmem:[%s182 + $0x104] sm:$0xf]
        %v283 = vld [vmem:[%s182 + $0x108] sm:$0xf]
        %v284 = vld [vmem:[%s182 + $0x10c] sm:$0xf]
        %v285 = vld [vmem:[%s182 + $0x110] sm:$0xf]
        %v286 = vld [vmem:[%s182 + $0x114] sm:$0xf]
        %v287 = vld [vmem:[%s182 + $0x118] sm:$0xf]
        %v288 = vld [vmem:[%s182 + $0x11c] sm:$0xf]
        %v289 = vld [vmem:[%s182 + $0x120] sm:$0xf]
        %v290 = vld [vmem:[%s182 + $0x124] sm:$0xf]
        %v291 = vld [vmem:[%s182 + $0x128] sm:$0xf]
        %v292 = vld [vmem:[%s182 + $0x12c] sm:$0xf]
        %v293 = vld [vmem:[%s182 + $0x130] sm:$0xf]
        %v294 = vld [vmem:[%s182 + $0x134] sm:$0xf]
        %v295 = vld [vmem:[%s182 + $0x138] sm:$0xf]
        %v296 = vld [vmem:[%s182 + $0x13c] sm:$0xf]
        %v297 = vld [vmem:[%s182 + $0x140] sm:$0xf]
        %v298 = vld [vmem:[%s182 + $0x144] sm:$0xf]
        %v299 = vld [vmem:[%s182 + $0x148] sm:$0xf]
        %v300 = vld [vmem:[%s182 + $0x14c] sm:$0xf]
        %v301 = vld [vmem:[%s182 + $0x150] sm:$0xf]
        %v302 = vld [vmem:[%s182 + $0x154] sm:$0xf]
        %v303 = vld [vmem:[%s182 + $0x158] sm:$0xf]
        %v304 = vld [vmem:[%s182 + $0x15c] sm:$0xf]
        %v305 = vld [vmem:[%s182 + $0x160] sm:$0xf]
        %v306 = vld [vmem:[%s182 + $0x164] sm:$0xf]
        %v307 = vld [vmem:[%s182 + $0x168] sm:$0xf]
        %v308 = vld [vmem:[%s182 + $0x16c] sm:$0xf]
        %v309 = vld [vmem:[%s182 + $0x170] sm:$0xf]
        %v310 = vld [vmem:[%s182 + $0x174] sm:$0xf]
        %v311 = vld [vmem:[%s182 + $0x178] sm:$0xf]
        %v312 = vld [vmem:[%s182 + $0x17c] sm:$0xf]
        %v325 = vunpack.c.l.b16 %v205
        %v326 = vunpack.c.h.b16 %v205
        %v327 = vunpack.c.l.b16 %v206
        %v328 = vunpack.c.h.b16 %v206
        %v329 = vunpack.c.l.b16 %v207
        %v330 = vunpack.c.h.b16 %v207
        %v331 = vunpack.c.l.b16 %v208
        %v332 = vunpack.c.h.b16 %v208
        %v333 = vunpack.c.l.b16 %v209
        %v334 = vunpack.c.h.b16 %v209
        %v335 = vunpack.c.l.b16 %v210
        %v336 = vunpack.c.h.b16 %v210
        %v337 = vunpack.c.l.b16 %v211
        %v338 = vunpack.c.h.b16 %v211
        %v339 = vunpack.c.l.b16 %v212
        %v340 = vunpack.c.h.b16 %v212
        %v341 = vunpack.c.l.b16 %v213
        %v342 = vunpack.c.h.b16 %v213
        %v343 = vunpack.c.l.b16 %v214
        %v344 = vunpack.c.h.b16 %v214
        %v345 = vunpack.c.l.b16 %v215
        %v346 = vunpack.c.h.b16 %v215
        %v347 = vunpack.c.l.b16 %v216
        %v348 = vunpack.c.h.b16 %v216
        %v349 = vpack.c.b16 %v331, %v325
        %v350 = vpack.c.b16 %v332, %v326
        %v351 = vpack.c.b16 %v333, %v327
        %v352 = vpack.c.b16 %v334, %v328
        %v353 = vpack.c.b16 %v335, %v329
        %v354 = vpack.c.b16 %v336, %v330
        %v355 = vpack.c.b16 %v343, %v337
        %v356 = vpack.c.b16 %v344, %v338
        %v357 = vpack.c.b16 %v345, %v339
        %v358 = vpack.c.b16 %v346, %v340
        %v359 = vpack.c.b16 %v347, %v341
        %v360 = vpack.c.b16 %v348, %v342
        %v469 = vunpack.c.l.b16 %v217
        %v470 = vunpack.c.l.b16 %v218
        %v471 = vunpack.c.l.b16 %v219
        %v472 = vunpack.c.l.b16 %v220
        %v473 = vunpack.c.l.b16 %v221
        %v474 = vunpack.c.l.b16 %v222
        %v475 = vunpack.c.l.b16 %v223
        %v476 = vunpack.c.l.b16 %v224
        %v477 = vunpack.c.l.b16 %v225
        %v478 = vunpack.c.l.b16 %v226
        %v479 = vunpack.c.l.b16 %v227
        %v480 = vunpack.c.l.b16 %v228
        %v481 = vunpack.c.l.b16 %v229
        %v482 = vunpack.c.l.b16 %v230
        %v483 = vunpack.c.l.b16 %v231
        %v484 = vunpack.c.l.b16 %v232
        %v485 = vunpack.c.l.b16 %v233
        %v486 = vunpack.c.l.b16 %v234
        %v487 = vunpack.c.l.b16 %v235
        %v488 = vunpack.c.l.b16 %v236
        %v489 = vunpack.c.l.b16 %v237
        %v490 = vunpack.c.l.b16 %v238
        %v491 = vunpack.c.l.b16 %v239
        %v492 = vunpack.c.l.b16 %v240
        %v493 = vunpack.c.l.b16 %v241
        %v494 = vunpack.c.l.b16 %v242
        %v495 = vunpack.c.l.b16 %v243
        %v496 = vunpack.c.l.b16 %v244
        %v497 = vunpack.c.l.b16 %v245
        %v498 = vunpack.c.l.b16 %v246
        %v499 = vunpack.c.l.b16 %v247
        %v500 = vunpack.c.l.b16 %v248
        %v501 = vunpack.c.l.b16 %v249
        %v502 = vunpack.c.l.b16 %v250
        %v503 = vunpack.c.l.b16 %v251
        %v504 = vunpack.c.l.b16 %v252
        %v505 = vunpack.c.l.b16 %v253
        %v506 = vunpack.c.l.b16 %v254
        %v507 = vunpack.c.l.b16 %v255
        %v508 = vunpack.c.l.b16 %v256
        %v509 = vunpack.c.l.b16 %v257
        %v510 = vunpack.c.l.b16 %v258
        %v511 = vunpack.c.l.b16 %v259
        %v512 = vunpack.c.l.b16 %v260
        %v513 = vunpack.c.l.b16 %v261
        %v514 = vunpack.c.l.b16 %v262
        %v515 = vunpack.c.l.b16 %v263
        %v516 = vunpack.c.l.b16 %v264
        %v517 = vunpack.c.l.b16 %v265
        %v518 = vunpack.c.l.b16 %v266
        %v519 = vunpack.c.l.b16 %v267
        %v520 = vunpack.c.l.b16 %v268
        %v521 = vunpack.c.l.b16 %v269
        %v522 = vunpack.c.l.b16 %v270
        %v523 = vunpack.c.l.b16 %v271
        %v524 = vunpack.c.l.b16 %v272
        %v525 = vunpack.c.l.b16 %v273
        %v526 = vunpack.c.l.b16 %v274
        %v527 = vunpack.c.l.b16 %v275
        %v528 = vunpack.c.l.b16 %v276
        %v529 = vunpack.c.l.b16 %v277
        %v530 = vunpack.c.l.b16 %v278
        %v531 = vunpack.c.l.b16 %v279
        %v532 = vunpack.c.l.b16 %v280
        %v533 = vunpack.c.l.b16 %v281
        %v534 = vunpack.c.l.b16 %v282
        %v535 = vunpack.c.l.b16 %v283
        %v536 = vunpack.c.l.b16 %v284
        %v537 = vunpack.c.l.b16 %v285
        %v538 = vunpack.c.l.b16 %v286
        %v539 = vunpack.c.l.b16 %v287
        %v540 = vunpack.c.l.b16 %v288
        %v541 = vunpack.c.l.b16 %v289
        %v542 = vunpack.c.l.b16 %v290
        %v543 = vunpack.c.l.b16 %v291
        %v544 = vunpack.c.l.b16 %v292
        %v545 = vunpack.c.l.b16 %v293
        %v546 = vunpack.c.l.b16 %v294
        %v547 = vunpack.c.l.b16 %v295
        %v548 = vunpack.c.l.b16 %v296
        %v549 = vunpack.c.l.b16 %v297
        %v550 = vunpack.c.l.b16 %v298
        %v551 = vunpack.c.l.b16 %v299
        %v552 = vunpack.c.l.b16 %v300
        %v553 = vunpack.c.l.b16 %v301
        %v554 = vunpack.c.l.b16 %v302
        %v555 = vunpack.c.l.b16 %v303
        %v556 = vunpack.c.l.b16 %v304
        %v557 = vunpack.c.l.b16 %v305
        %v558 = vunpack.c.l.b16 %v306
        %v559 = vunpack.c.l.b16 %v307
        %v560 = vunpack.c.l.b16 %v308
        %v561 = vunpack.c.l.b16 %v309
        %v562 = vunpack.c.l.b16 %v310
        %v563 = vunpack.c.l.b16 %v311
        %v564 = vunpack.c.l.b16 %v312
        %v565 = vpack.c.b16 %v470, %v469
        %v566 = vpack.c.b16 %v472, %v471
        %v567 = vpack.c.b16 %v474, %v473
        %v568 = vpack.c.b16 %v476, %v475
        %v569 = vpack.c.b16 %v478, %v477
        %v570 = vpack.c.b16 %v480, %v479
        %v571 = vpack.c.b16 %v482, %v481
        %v572 = vpack.c.b16 %v484, %v483
        %v573 = vpack.c.b16 %v486, %v485
        %v574 = vpack.c.b16 %v488, %v487
        %v575 = vpack.c.b16 %v490, %v489
        %v576 = vpack.c.b16 %v492, %v491
        %v577 = vpack.c.b16 %v494, %v493
        %v578 = vpack.c.b16 %v496, %v495
        %v579 = vpack.c.b16 %v498, %v497
        %v580 = vpack.c.b16 %v500, %v499
        %v581 = vpack.c.b16 %v502, %v501
        %v582 = vpack.c.b16 %v504, %v503
        %v583 = vpack.c.b16 %v506, %v505
        %v584 = vpack.c.b16 %v508, %v507
        %v585 = vpack.c.b16 %v510, %v509
        %v586 = vpack.c.b16 %v512, %v511
        %v587 = vpack.c.b16 %v514, %v513
        %v588 = vpack.c.b16 %v516, %v515
        %v589 = vpack.c.b16 %v518, %v517
        %v590 = vpack.c.b16 %v520, %v519
        %v591 = vpack.c.b16 %v522, %v521
        %v592 = vpack.c.b16 %v524, %v523
        %v593 = vpack.c.b16 %v526, %v525
        %v594 = vpack.c.b16 %v528, %v527
        %v595 = vpack.c.b16 %v530, %v529
        %v596 = vpack.c.b16 %v532, %v531
        %v597 = vpack.c.b16 %v534, %v533
        %v598 = vpack.c.b16 %v536, %v535
        %v599 = vpack.c.b16 %v538, %v537
        %v600 = vpack.c.b16 %v540, %v539
        %v601 = vpack.c.b16 %v542, %v541
        %v602 = vpack.c.b16 %v544, %v543
        %v603 = vpack.c.b16 %v546, %v545
        %v604 = vpack.c.b16 %v548, %v547
        %v605 = vpack.c.b16 %v550, %v549
        %v606 = vpack.c.b16 %v552, %v551
        %v607 = vpack.c.b16 %v554, %v553
        %v608 = vpack.c.b16 %v556, %v555
        %v609 = vpack.c.b16 %v558, %v557
        %v610 = vpack.c.b16 %v560, %v559
        %v611 = vpack.c.b16 %v562, %v561
        %v612 = vpack.c.b16 %v564, %v563
        %661 = vmatprep.subr.bf16.mxu0 0
        %662 = vmatpush1.bf16.msra.mxu0 %v565
        %663 = vmatprep.subr.bf16.mxu0 0
        %664 = vmatpush1.bf16.msra.mxu0 %v566
        %665 = vmatprep.subr.bf16.mxu0 0
        %666 = vmatpush1.bf16.msra.mxu0 %v567
        %667 = vmatprep.subr.bf16.mxu0 0
        %668 = vmatpush1.bf16.msra.mxu0 %v568
        %669 = vmatprep.subr.bf16.mxu0 0
        %670 = vmatpush1.bf16.msra.mxu0 %v569
        %671 = vmatprep.subr.bf16.mxu0 0
        %672 = vmatpush1.bf16.msra.mxu0 %v570
        %673 = vmatprep.subr.bf16.mxu0 0
        %674 = vmatpush1.bf16.msra.mxu0 %v571
        %675 = vmatprep.subr.bf16.mxu0 0
        %676 = vmatpush1.bf16.msra.mxu0 %v572
        %677 = vmatprep.subr.bf16.mxu0 0
        %678 = vmatpush1.bf16.msra.mxu0 %v573
        %679 = vmatprep.subr.bf16.mxu0 0
        %680 = vmatpush1.bf16.msra.mxu0 %v574
        %681 = vmatprep.subr.bf16.mxu0 0
        %682 = vmatpush1.bf16.msra.mxu0 %v575
        %683 = vmatprep.subr.bf16.mxu0 0
        %684 = vmatpush1.bf16.msra.mxu0 %v576
        %685 = vmatprep.subr.bf16.mxu0 0
        %686 = vmatpush1.bf16.msra.mxu0 %v577
        %687 = vmatprep.subr.bf16.mxu0 0
        %688 = vmatpush1.bf16.msra.mxu0 %v578
        %689 = vmatprep.subr.bf16.mxu0 0
        %690 = vmatpush1.bf16.msra.mxu0 %v579
        %691 = vmatprep.subr.bf16.mxu0 0
        %692 = vmatpush1.bf16.msra.mxu0 %v580
        %693 = vmatprep.mubr.bf16.mxu0 %v350
        %694 = vmatmul.mubr.bf16.gmra.mrb[0].mxu0 %v349
        %v695 = vpop.f32.mrb[0].mxu0
        %v696 = vadd.f32 0.0, %v695
        %v697 = vpop.f32.mrb[0].mxu0
        %v698 = vpop.f32.mrb[0].mxu0
        %v699 = vadd.f32 0.0, %v698
        %v700 = vpop.f32.mrb[0].mxu0
        %701 = vmatprep.mubr.bf16.mxu0 %v356
        %702 = vmatmul.mubr.bf16.gmra.mrb[0].mxu0 %v355
        %v703 = vpop.f32.mrb[0].mxu0
        %v704 = vadd.f32 0.0, %v703
        %v705 = vpop.f32.mrb[0].mxu0
        %v706 = vpop.f32.mrb[0].mxu0
        %v707 = vadd.f32 0.0, %v706
        %v708 = vpop.f32.mrb[0].mxu0
        %709 = vdwg.mxu0
        %710 = vmatprep.subr.bf16.mxu0 0
        %711 = vmatpush1.bf16.msra.mxu0 %v581
        %712 = vmatprep.subr.bf16.mxu0 0
        %713 = vmatpush1.bf16.msra.mxu0 %v582
        %714 = vmatprep.subr.bf16.mxu0 0
        %715 = vmatpush1.bf16.msra.mxu0 %v583
        %716 = vmatprep.subr.bf16.mxu0 0
        %717 = vmatpush1.bf16.msra.mxu0 %v584
        %718 = vmatprep.subr.bf16.mxu0 0
        %719 = vmatpush1.bf16.msra.mxu0 %v585
        %720 = vmatprep.subr.bf16.mxu0 0
        %721 = vmatpush1.bf16.msra.mxu0 %v586
        %722 = vmatprep.subr.bf16.mxu0 0
        %723 = vmatpush1.bf16.msra.mxu0 %v587
        %724 = vmatprep.subr.bf16.mxu0 0
        %725 = vmatpush1.bf16.msra.mxu0 %v588
        %726 = vmatprep.subr.bf16.mxu0 0
        %727 = vmatpush1.bf16.msra.mxu0 %v589
        %728 = vmatprep.subr.bf16.mxu0 0
        %729 = vmatpush1.bf16.msra.mxu0 %v590
        %730 = vmatprep.subr.bf16.mxu0 0
        %731 = vmatpush1.bf16.msra.mxu0 %v591
        %732 = vmatprep.subr.bf16.mxu0 0
        %733 = vmatpush1.bf16.msra.mxu0 %v592
        %734 = vmatprep.subr.bf16.mxu0 0
        %735 = vmatpush1.bf16.msra.mxu0 %v593
        %736 = vmatprep.subr.bf16.mxu0 0
        %737 = vmatpush1.bf16.msra.mxu0 %v594
        %738 = vmatprep.subr.bf16.mxu0 0
        %739 = vmatpush1.bf16.msra.mxu0 %v595
        %740 = vmatprep.subr.bf16.mxu0 0
        %741 = vmatpush1.bf16.msra.mxu0 %v596
        %742 = vmatprep.mubr.bf16.mxu0 %v352
        %743 = vmatmul.mubr.bf16.gmra.mrb[0].mxu0 %v351
        %v744 = vpop.f32.mrb[0].mxu0
        %v745 = vadd.f32 %v696, %v744
        %v746 = vpop.f32.mrb[0].mxu0
        %v747 = vpop.f32.mrb[0].mxu0
        %v748 = vadd.f32 %v699, %v747
        %v749 = vpop.f32.mrb[0].mxu0
        %750 = vmatprep.mubr.bf16.mxu0 %v358
        %751 = vmatmul.mubr.bf16.gmra.mrb[0].mxu0 %v357
        %v752 = vpop.f32.mrb[0].mxu0
        %v753 = vadd.f32 %v704, %v752
        %v754 = vpop.f32.mrb[0].mxu0
        %v755 = vpop.f32.mrb[0].mxu0
        %v756 = vadd.f32 %v707, %v755
        %v757 = vpop.f32.mrb[0].mxu0
        %758 = vdwg.mxu0
        %759 = vmatprep.subr.bf16.mxu0 0
        %760 = vmatpush1.bf16.msra.mxu0 %v597
        %761 = vmatprep.subr.bf16.mxu0 0
        %762 = vmatpush1.bf16.msra.mxu0 %v598
        %763 = vmatprep.subr.bf16.mxu0 0
        %764 = vmatpush1.bf16.msra.mxu0 %v599
        %765 = vmatprep.subr.bf16.mxu0 0
        %766 = vmatpush1.bf16.msra.mxu0 %v600
        %767 = vmatprep.subr.bf16.mxu0 0
        %768 = vmatpush1.bf16.msra.mxu0 %v601
        %769 = vmatprep.subr.bf16.mxu0 0
        %770 = vmatpush1.bf16.msra.mxu0 %v602
        %771 = vmatprep.subr.bf16.mxu0 0
        %772 = vmatpush1.bf16.msra.mxu0 %v603
        %773 = vmatprep.subr.bf16.mxu0 0
        %774 = vmatpush1.bf16.msra.mxu0 %v604
        %775 = vmatprep.subr.bf16.mxu0 0
        %776 = vmatpush1.bf16.msra.mxu0 %v605
        %777 = vmatprep.subr.bf16.mxu0 0
        %778 = vmatpush1.bf16.msra.mxu0 %v606
        %779 = vmatprep.subr.bf16.mxu0 0
        %780 = vmatpush1.bf16.msra.mxu0 %v607
        %781 = vmatprep.subr.bf16.mxu0 0
        %782 = vmatpush1.bf16.msra.mxu0 %v608
        %783 = vmatprep.subr.bf16.mxu0 0
        %784 = vmatpush1.bf16.msra.mxu0 %v609
        %785 = vmatprep.subr.bf16.mxu0 0
        %786 = vmatpush1.bf16.msra.mxu0 %v610
        %787 = vmatprep.subr.bf16.mxu0 0
        %788 = vmatpush1.bf16.msra.mxu0 %v611
        %789 = vmatprep.subr.bf16.mxu0 0
        %790 = vmatpush1.bf16.msra.mxu0 %v612
        %791 = vmatprep.mubr.bf16.mxu0 %v354
        %792 = vmatmul.mubr.bf16.gmra.mrb[0].mxu0 %v353
        %v793 = vpop.f32.mrb[0].mxu0
        %v794 = vadd.f32 %v745, %v793
        %v795 = vpop.f32.mrb[0].mxu0
        %v796 = vpop.f32.mrb[0].mxu0
        %v797 = vadd.f32 %v748, %v796
        %v798 = vpop.f32.mrb[0].mxu0
        %799 = vmatprep.mubr.bf16.mxu0 %v360
        %800 = vmatmul.mubr.bf16.gmra.mrb[0].mxu0 %v359
        %v801 = vpop.f32.mrb[0].mxu0
        %v802 = vadd.f32 %v753, %v801
        %v803 = vpop.f32.mrb[0].mxu0
        %v804 = vpop.f32.mrb[0].mxu0
        %v805 = vadd.f32 %v756, %v804
        %v806 = vpop.f32.mrb[0].mxu0
        %807 = vdwg.mxu0
        %p808 = scmp.eq.s32.totalorder %s19, 0
        // Predicated region
        $region45: #{tpu_custom_call.1} parent=31 // pred_check
          %p809 = pneg %p808
        $region46: #{tpu_custom_call.1} parent=31 // pred_check_branch
          %811 = sbr.rel (%p809) target = $region48
        $region47: #{tpu_custom_call.1} parent=31 // pred_region
          %812 = vst [vmem:[#allocation2] sm:$0xff] %v794
          %813 = vst [vmem:[#allocation2 + $0x8] sm:$0xff] %v797
          %814 = vst [vmem:[#allocation2 + $0x10] sm:$0xff] %v802
          %815 = vst [vmem:[#allocation2 + $0x18] sm:$0xff] %v805
        $region48: #{tpu_custom_call.1} parent=31 // pred_fallthru
          _
        %p816 = scmp.ne.s32.totalorder %s19, 0
        // Predicated region
        $region49: #{tpu_custom_call.1} parent=31 // pred_check
          %p817 = pneg %p816
        $region50: #{tpu_custom_call.1} parent=31 // pred_check_branch
          %819 = sbr.rel (%p817) target = $region52
        $region51: #{tpu_custom_call.1} parent=31 // pred_region
          %v820 = vld [vmem:[#allocation2] sm:$0xff]
          %v821 = vld [vmem:[#allocation2 + $0x8] sm:$0xff]
          %v822 = vld [vmem:[#allocation2 + $0x10] sm:$0xff]
          %v823 = vld [vmem:[#allocation2 + $0x18] sm:$0xff]
          %vm828 = vcmask 1046528
          %v829 = vrot.slane %v820, 1
          %v830 = vrot.slane %v821, 1
          %v831 = vsel %vm828, %v829, %v830
          %v832 = vrot.slane %v822, 1
          %v833 = vsel %vm828, %v830, %v832
          %v834 = vrot.slane %v823, 1
          %v835 = vsel %vm828, %v832, %v834
          %v840 = vsel %vm828, %v834, 0.0
          %v841 = vadd.f32 %v794, %v831
          %v842 = vadd.f32 %v797, %v833
          %v843 = vadd.f32 %v802, %v835
          %v844 = vadd.f32 %v805, %v840
          %845 = vst [vmem:[#allocation2] sm:$0xff] %v841
          %846 = vst [vmem:[#allocation2 + $0x8] sm:$0xff] %v842
          %847 = vst [vmem:[#allocation2 + $0x10] sm:$0xff] %v843
          %848 = vst [vmem:[#allocation2 + $0x18] sm:$0xff] %v844
        $region52: #{tpu_custom_call.1} parent=31 // pred_fallthru
          _
        %p849 = scmp.eq.s32.totalorder %s19, 7
        // Predicated region
        $region53: #{tpu_custom_call.1} parent=31 // pred_check
          %p850 = pneg %p849
        $region54: #{tpu_custom_call.1} parent=31 // pred_check_branch
          %852 = sbr.rel (%p850) target = $region56
        $region55: #{tpu_custom_call.1} parent=31 // pred_region
          %v853 = vld [vmem:[#allocation2] sm:$0xff]
          %v854 = vld [vmem:[#allocation2 + $0x8] sm:$0xff]
          %v855 = vld [vmem:[#allocation2 + $0x10] sm:$0xff]
          %v856 = vld [vmem:[#allocation2 + $0x18] sm:$0xff]
          %v857 = vld [vmem:[#allocation8] sm:$0x1]
          %v858 = vld [vmem:[#allocation8 + $0x1] sm:$0x1]
          %v859 = vld [vmem:[#allocation8 + $0x2] sm:$0x1]
          %v860 = vld [vmem:[#allocation8 + $0x3] sm:$0x1]
          %v861 = vlaneseq
          %v862 = vshrl.u32 %v861, 7
          %v863 = vadd.s32 %v862, 8
          %v864 = vcvt.s32.f32 %v862
          %v865 = vcvt.s32.f32 %v863
          %v866 = vlaneseq
          %v867 = vshrl.u32 %v866, 7
          %v868 = vsub.s32 0, %v867
          %v869 = vrot.slane %v857, %v868
          %vm870 = vcmp.lt.f32.partialorder %v864, %v869
          %vm871 = vcmp.lt.f32.partialorder %v865, %v869
          %v872 = vsel %vm870, 1, 0
          %v873 = vsel %vm871, 1, 0
          %v874 = vcvt.s32.f32 %v872
          %v875 = vcvt.s32.f32 %v873
          %v876 = vmul.f32 %v853, %v874
          %v877 = vmul.f32 %v854, %v875
          %v878 = vmul.f32 %v855, %v874
          %v879 = vmul.f32 %v856, %v875
          %v880 = vadd.f32 %v876, %v877
          %v881 = vadd.f32 %v880, %v878
          %v882 = vadd.f32 %v881, %v879
          %v883 = vrot.slane %v882, 4
          %v884 = vadd.f32 %v882, %v883
          %v885 = vrot.slane %v884, 2
          %v886 = vadd.f32 %v884, %v885
          %v887 = vrot.slane %v886, 1
          %v888 = vadd.f32 %v886, %v887
          %v889 = vmul.f32 %v876, %v853
          %v890 = vmul.f32 %v877, %v854
          %v891 = vmul.f32 %v878, %v855
          %v892 = vmul.f32 %v879, %v856
          %v893 = vadd.f32 %v889, %v890
          %v894 = vadd.f32 %v893, %v891
          %v895 = vadd.f32 %v894, %v892
          %v896 = vrot.slane %v895, 4
          %v897 = vadd.f32 %v895, %v896
          %v898 = vrot.slane %v897, 2
          %v899 = vadd.f32 %v897, %v898
          %v900 = vrot.slane %v899, 1
          %v901 = vadd.f32 %v899, %v900
          %v902 = vmul.f32 %v888, %v858
          %v903 = vmul.f32 %v901, %v858
          %v904 = vmul.f32 %v902, %v902
          %v905 = vsub.f32 %v903, %v904
          %v906 = vmax.f32 %v905, 0.0
          %v907 = vadd.f32 %v906, 1e-05
          %v908 = vrsqrt.pop %v907
          %v909 = vmul.f32 %v859, %v908
          %v910 = vmul.f32 %v902, %v909
          %v911 = vsub.f32 %v860, %v910
          %v912 = vlaneseq
          %v913 = vshrl.u32 %v912, 7
          %v914 = vsub.s32 0, %v913
          %v915 = vrot.slane %v909, %v914
          %v916 = vmul.f32 %v853, %v915
          %v917 = vmul.f32 %v854, %v915
          %v918 = vmul.f32 %v855, %v915
          %v919 = vmul.f32 %v856, %v915
          %v920 = vlaneseq
          %v921 = vshrl.u32 %v920, 7
          %v922 = vsub.s32 0, %v921
          %v923 = vrot.slane %v911, %v922
          %v924 = vadd.f32 %v916, %v923
          %v925 = vadd.f32 %v917, %v923
          %v926 = vadd.f32 %v918, %v923
          %v927 = vadd.f32 %v919, %v923
          %v928 = vmax.f32 %v924, 0.0
          %v929 = vmax.f32 %v925, 0.0
          %v930 = vmax.f32 %v926, 0.0
          %v931 = vmax.f32 %v927, 0.0
          %v932 = vmul.f32 %v928, %v874
          %v933 = vmul.f32 %v929, %v875
          %v934 = vmul.f32 %v930, %v874
          %v935 = vmul.f32 %v931, %v875
          %v936 = vmax.f32 %v932, %v933
          %v937 = vrot.slane %v936, 4
          %v938 = vmax.f32 %v936, %v937
          %v939 = vrot.slane %v938, 2
          %v940 = vmax.f32 %v938, %v939
          %v941 = vrot.slane %v940, 1
          %v942 = vmax.f32 %v940, %v941
          %v943 = vmax.f32 %v934, %v935
          %v944 = vrot.slane %v943, 4
          %v945 = vmax.f32 %v943, %v944
          %v946 = vrot.slane %v945, 2
          %v947 = vmax.f32 %v945, %v946
          %v948 = vrot.slane %v947, 1
          %v949 = vmax.f32 %v947, %v948
          %vm952 = vcmask 1041409
          %v953 = vsel %vm952, %v949, %v942
          %955 = vst [vmem:[#allocation9] sm:$0x3] %v953
        $region56: #{tpu_custom_call.1} parent=31 // pred_fallthru
          _
        // Predicated region
        $region57: #{tpu_custom_call.1} parent=31 // pred_check
          %p956 = pneg %p100
        $region58: #{tpu_custom_call.1} parent=31 // pred_check_branch
          %958 = sbr.rel (%p956) target = $region60
        $region59: #{tpu_custom_call.1} parent=31 // pred_region
          %s960 = ssub.s32 32, 32
          %961 = vsyncadd [#allocation5], %s960
          %s963 = sshll.u32 [#allocation9], 4
          %s964 = int_to_ptr.vmem [resolvable:$true] %s963
          %966 = dma.vmem_to_hbm [thread:$0]  %s964, 32, %s3, [#allocation5]
        $region60: #{tpu_custom_call.1} parent=31 // pred_fallthru
          _
        // Predicated region
        $region61: #{tpu_custom_call.1} parent=31 // pred_check
          %p967 = pneg %p100
        $region62: #{tpu_custom_call.1} parent=31 // pred_check_branch
          %969 = sbr.rel (%p967) target = $region64
        $region63: #{tpu_custom_call.1} parent=31 // pred_region
          %970 = dma.done [#allocation5], 32
        $region64: #{tpu_custom_call.1} parent=31 // pred_fallthru
          _
      $region32: #{tpu_custom_call.1} parent=5 // pred_fallthru
        _
      %p971 = scmp.le.s32.totalorder 2, %s14
      // Predicated region
      $region65: #{tpu_custom_call.1} parent=5 // pred_check
        %p972 = pneg %p971
      $region66: #{tpu_custom_call.1} parent=5 // pred_check_branch
        %974 = sbr.rel (%p972) target = $region68
      $region67: #{tpu_custom_call.1} parent=5 // pred_region
        %s975 = ssub.s32 %s14, 2
      $region68: #{tpu_custom_call.1} parent=5 // pred_fallthru
        _
    $region6: #{tpu_custom_call.1} parent=1 // loop_footer
      %s18 = sadd.s32 1, %s14
    $region7: #{tpu_custom_call.1} parent=1 // loop_footer_branch
      %13 = sbr.rel target = $region3
    $region8: #{tpu_custom_call.1} parent=1 // loop_exit
      _
    %976 = vsyncpa [#allocation4], 1
    %s977 = scalar_lea.sflag [#allocation4], 1
    %978 = vsyncpa %s977, 1
    %979 = vsyncpa [#allocation7], 1
    %s980 = scalar_lea.sflag [#allocation7], 1
    %981 = vsyncpa %s980, 1
    %982 = vsyncpa [#allocation5], 1
    %s983 = scalar_lea.sflag [#allocation5], 1
    %984 = vsyncpa %s983, 1

</llo_original>
